<compile_context>
chip_gen: v7x
topology: tpu7x:2x2x1
jax: 0.10.0
libtpu: 0.0.40
codegen_flags: <defaults>
</compile_context>

<pallas_src>
import functools

import jax
import jax.numpy as jnp
from jax.experimental import pallas as pl
from jax.experimental.pallas import tpu as pltpu

_TARGET_BLOCK_BYTES = 4 * 1024 * 1024   # ~4 MiB per block (dtype-independent)
_LANE_CANDIDATES = (2048, 1024, 512, 256, 128)
_VMEM_LIMIT_BYTES = 32 * 1024 * 1024    # safe on v5e/v6e/v7x


def _relu(x):
    # dtype-matched zero: correct for integer dtypes too (no float round-trip).
    return jnp.maximum(x, jnp.zeros((), x.dtype))


def _make_elementwise_kernel(func):
    def kernel(x_ref, o_ref):
        # Whole-tile elementwise op on the VPU (EUP for transcendentals).
        o_ref[...] = func(x_ref[...]).astype(o_ref.dtype)
    return kernel


def _round_up(x, m):
    return (x + m - 1) // m * m


def _cdiv(a, b):
    return (a + b - 1) // b


@functools.partial(jax.jit, static_argnames=("func",))
def lambda_forward(x, func=_relu):
    """Pallas implementation of Lambda(func).forward(x) for elementwise func.

    x: array of any shape (e.g. NCHW float32 [N, C, H, W]).
    returns: same shape/dtype as x, equal to func(x).
    """
    orig_shape = x.shape
    total = x.size
    if total == 0:
        return x

    itemsize = jnp.dtype(x.dtype).itemsize
    # Sublane multiple depends on dtype packing (f32 -> 8, bf16 -> 16, i8 -> 32).
    sublane = max(8, 32 // max(1, itemsize))
    quantum = sublane * 128

    flat = x.reshape(-1)

    # ---- no-pad fast path (common case): size already a multiple of
    # sublane*128 -> pure bitcast reshape, no extra HBM traffic. ----
    if total % quantum == 0:
        padded_total = total
    else:
        # Odd sizes only: pad once (extra read+write) and slice at the end.
        padded_total = _round_up(total, quantum)
        flat = jnp.pad(flat, (0, padded_total - total))

    # Largest lane (multiple of 128) that keeps rows a multiple of sublane.
    lane = 128
    for cand in _LANE_CANDIDATES:
        if padded_total % (cand * sublane) == 0:
            lane = cand
            break
    rows = padded_total // lane  # guaranteed multiple of sublane, >= sublane

    # Dtype-aware block rows: keep each block ~4 MiB of bytes.
    cap_rows = max(sublane,
                   (_TARGET_BLOCK_BYTES // (lane * itemsize)) // sublane * sublane)
    block_rows = min(cap_rows, rows)

    # v7x megacore: if everything fits in one block but there are >= 2
    # sublane-rows of work, split into 2 blocks so both TensorCores stream.
    if _cdiv(rows, block_rows) == 1 and rows >= 2 * sublane:
        block_rows = _round_up(_cdiv(rows, 2), sublane)

    grid = (_cdiv(rows, block_rows),)
    x2d = flat.reshape(rows, lane)

    out2d = pl.pallas_call(
        _make_elementwise_kernel(func),
        out_shape=jax.ShapeDtypeStruct((rows, lane), x.dtype),
        grid=grid,
        in_specs=[pl.BlockSpec((block_rows, lane), lambda i: (i, 0))],
        out_specs=pl.BlockSpec((block_rows, lane), lambda i: (i, 0)),
        cost_estimate=pl.CostEstimate(
            flops=padded_total,
            transcendentals=0,
            bytes_accessed=2 * padded_total * itemsize,
        ),
        compiler_params=pltpu.CompilerParams(
            dimension_semantics=("parallel",),
            vmem_limit_bytes=_VMEM_LIMIT_BYTES,
        ),
    )(x2d)

    out_flat = out2d.reshape(-1)
    if padded_total != total:
        out_flat = out_flat[:total]
    return out_flat.reshape(orig_shape)


if __name__ == "__main__":
    key = jax.random.PRNGKey(0)

    # Small NCHW input consistent with a conv-style NAS pipeline (no-pad path).
    x = jax.random.normal(key, (2, 4, 16, 16), dtype=jnp.float32)
    out = lambda_forward(x)
    jax.block_until_ready(out)
    assert out.shape == x.shape and out.dtype == x.dtype
    assert jnp.allclose(out, jnp.maximum(x, 0.0), atol=0.0, rtol=0.0)

    # Larger input exercising the tiled, multi-block (pipelined) path.
    x_big = jax.random.normal(jax.random.PRNGKey(0), (8, 16, 128, 128),
                              dtype=jnp.float32)
    out_big = lambda_forward(x_big)
    jax.block_until_ready(out_big)
    assert jnp.allclose(out_big, jnp.maximum(x_big, 0.0), atol=0.0, rtol=0.0)

    # Odd-sized input exercising the pad+slice fallback path.
    x_odd = jax.random.normal(jax.random.PRNGKey(0), (3, 5, 7),
                              dtype=jnp.float32)
    out_odd = lambda_forward(x_odd)
    jax.block_until_ready(out_odd)
    assert jnp.allclose(out_odd, jnp.maximum(x_odd, 0.0), atol=0.0, rtol=0.0)

    # Demonstrate that Lambda's func is parameterized (any elementwise func).
    out_tanh = lambda_forward(x, func=jnp.tanh)
    jax.block_until_ready(out_tanh)
    assert jnp.allclose(out_tanh, jnp.tanh(x), atol=1e-6, rtol=1e-6)

    print("KERNEL_OK")
</pallas_src>

<mosaic_0001>
module attributes {stable_mosaic.version = 11 : i64} {
  func.func @kernel(%arg0: i32, %arg1: memref<8x256xf32, #tpu.memory_space<vmem>>, %arg2: memref<8x256xf32, #tpu.memory_space<vmem>>) attributes {dimension_semantics = [#tpu.dimension_semantics<parallel>], iteration_bounds = array<i64: 1>, scalar_prefetch = 0 : i64, scratch_operands = 0 : i64, tpu.core_type = #tpu.core_type<tc>, window_params = [{transform_indices = @transform_0, window_bounds = array<i64: 8, 256>}, {transform_indices = @transform_1, window_bounds = array<i64: 8, 256>}]} {
    %c0 = arith.constant 0 : index
    %c0_0 = arith.constant 0 : index
    %0 = vector.load %arg1[%c0, %c0_0] : memref<8x256xf32, #tpu.memory_space<vmem>>, vector<8x256xf32>
    %cst = arith.constant 0.000000e+00 : f32
    %1 = vector.broadcast %cst : f32 to vector<8x256xf32>
    %2 = arith.maximumf %0, %1 : vector<8x256xf32>
    %c0_1 = arith.constant 0 : index
    %c0_2 = arith.constant 0 : index
    %3 = vector.load %arg2[%c0_1, %c0_2] : memref<8x256xf32, #tpu.memory_space<vmem>>, vector<8x256xf32>
    tpu.vector_store %arg2[%c0_1, %c0_2], %2 {strides = array<i32>} : memref<8x256xf32, #tpu.memory_space<vmem>>, vector<8x256xf32>,
    return
  }
  func.func @transform_0(%arg0: i32) -> (i32, i32) {
    %c0_i32 = arith.constant 0 : i32
    %c0_i32_0 = arith.constant 0 : i32
    return %arg0, %c0_i32 : i32, i32
  }
  func.func @transform_1(%arg0: i32) -> (i32, i32) {
    %c0_i32 = arith.constant 0 : i32
    %c0_i32_0 = arith.constant 0 : i32
    return %arg0, %c0_i32 : i32, i32
  }
}

</mosaic_0001>

<llo_original>
// kernel: lambda_forward.1
$region0: #{lambda_forward.1}
  #allocation0 [shape = 'u32[]', space=smem, size = 0x4, offset = 0x4, fixed_abs, tag = 'smem constant byte address 0x4 - core index']
  #allocation1 [shape = 'u32[144,128]{1,0:T(1,128)}', space=vmem, size = 0x12000, scoped, tag = 'internal scratch']
  %s0 = inlined_call_operand.vmem [shape: f32[8,256], index: 0, kind: input, shape index: {}]
  %s1 = inlined_call_operand.vmem [shape: f32[8,256], index: 1, kind: output, shape index: {}]
  %s2 = sld [smem:[#allocation0]]
  $region14: #{lambda_forward.1} parent=0
    _
  %s4 = ssub.s32 1, %s2
  %s5 = scalar_select 0, %s4, %s2
  // Predicated region
  $region2: #{lambda_forward.1} parent=0 // pred_check
    _
  $region3: #{lambda_forward.1} parent=0 // pred_check_branch
    %7 = sbr.rel (0) target = $region5
  $region4: #{lambda_forward.1} parent=0 // pred_region
    _
  $region5: #{lambda_forward.1} parent=0 // pred_fallthru
    _
  %v8 = vld [vmem:[%s0] sm:$0xff]
  %v9 = vld [vmem:[%s0 + $0x8] sm:$0xff]
  %v10 = vmax.f32 %v8, 0.0
  %v11 = vmax.f32 %v9, 0.0
  %12 = vst [vmem:[%s1] sm:$0xff] %v10
  %13 = vst [vmem:[%s1 + $0x8] sm:$0xff] %v11
  // Predicated region
  $region6: #{lambda_forward.1} parent=0 // pred_check
    _
  $region7: #{lambda_forward.1} parent=0 // pred_check_branch
    %15 = sbr.rel (0) target = $region9
  $region8: #{lambda_forward.1} parent=0 // pred_region
    _
  $region9: #{lambda_forward.1} parent=0 // pred_fallthru
    _
  // Predicated region
  $region10: #{lambda_forward.1} parent=0 // pred_check
    _
  $region11: #{lambda_forward.1} parent=0 // pred_check_branch
    %17 = sbr.rel (0) target = $region13
  $region12: #{lambda_forward.1} parent=0 // pred_region
    _
  $region13: #{lambda_forward.1} parent=0 // pred_fallthru
    _

</llo_original>
